<compile_context>
chip_gen: v7x
topology: tpu7x:2x2x1
jax: 0.10.0
libtpu: 0.0.40
codegen_flags: <defaults>
</compile_context>

<pallas_src>
import jax
import jax.numpy as jnp
from jax.experimental import pallas as pl
from jax.experimental.pallas import tpu as pltpu


def _round_up(n: int, m: int) -> int:
    return (n + m - 1) // m * m


def _cdiv(a: int, b: int) -> int:
    return -(-a // b)


def mlp_kernel(x_ref, w1_ref, b1_ref, w2_ref, b2_ref, o_ref):
    # fc1 (MXU, f32 accumulation) + bias + sigmoid (exp on EUP via logistic lowering)
    h = jnp.dot(x_ref[...], w1_ref[...], preferred_element_type=jnp.float32)
    h = jax.nn.sigmoid(h + b1_ref[...])
    # fc2 (MXU) + bias
    out = jnp.dot(h.astype(w2_ref.dtype), w2_ref[...],
                  preferred_element_type=jnp.float32) + b2_ref[...]
    o_ref[...] = out.astype(o_ref.dtype)


def _pick_tile_b(B, d_in, h_p, d_out, in_itemsize, budget_bytes, max_tile=8192):
    """Largest batch tile (multiple of 8) whose working set fits the VMEM budget."""
    # Per batch-row VMEM bytes: double-buffered x + out blocks, plus the f32
    # sigmoid intermediate (counted twice for temporaries / headroom).
    per_row = 2 * in_itemsize * d_in + 2 * 4 * d_out + 2 * 4 * h_p
    weights = 2 * (in_itemsize * d_in * h_p + 4 * h_p
                   + in_itemsize * h_p * d_out + 4 * d_out)
    tb = max(8, min(max_tile, (budget_bytes - weights) // max(per_row, 1)))
    tb = max(8, min((int(tb) // 8) * 8, _round_up(B, 8)))
    # Keep the grid length even when >1 so v7x's two TensorCores both get work.
    g = _cdiv(B, tb)
    if g > 1 and g % 2 == 1:
        g += 1
        tb = max(8, _round_up(_cdiv(B, g), 8))
    return tb


def net_forward(x, w1, b1, w2, b2, *, tile_b=None, use_pallas=None,
                compute_dtype=None, vmem_budget_bytes=24 * 1024 * 1024):
    """x: [B, D_in]; w1: [D_in, H]; b1: [H]; w2: [H, D_out]; b2: [D_out]."""
    B, d_in = x.shape
    h = w1.shape[1]
    d_out = w2.shape[1]
    out_dtype = x.dtype

    if use_pallas is None:
        # At toy sizes pallas_call launch overhead dominates; fused XLA wins.
        use_pallas = B * max(d_in, h) >= (1 << 16)
    if not use_pallas:
        return (jax.nn.sigmoid(x @ w1 + b1) @ w2 + b2).astype(out_dtype)

    if compute_dtype is not None:
        # bf16 x/w halves HBM bytes on v6e/v7x; accumulation stays f32.
        x = x.astype(compute_dtype)
        w1 = w1.astype(compute_dtype)
        w2 = w2.astype(compute_dtype)

    # Only the tiny, grid-invariant weights get lane padding (hidden -> 128).
    # x and the output stay unpadded; their blocks use the full last-dim extent.
    h_p = _round_up(h, 128)
    w1_p = jnp.zeros((d_in, h_p), w1.dtype).at[:, :h].set(w1)
    b1_p = jnp.zeros((1, h_p), jnp.float32).at[0, :h].set(b1.astype(jnp.float32))
    # Zero rows of w2 for padded hidden units -> sigmoid(0)=0.5 padding
    # contributes nothing to the real outputs.
    w2_p = jnp.zeros((h_p, d_out), w2.dtype).at[:h, :].set(w2)
    b2_p = b2.reshape(1, d_out).astype(jnp.float32)

    in_itemsize = jnp.dtype(x.dtype).itemsize
    if tile_b is None:
        tb = _pick_tile_b(B, d_in, h_p, d_out, in_itemsize, vmem_budget_bytes)
    else:
        tb = tile_b
    tb = max(8, min((int(tb) // 8) * 8, _round_up(B, 8)))
    grid_len = _cdiv(B, tb)

    cost = pl.CostEstimate(
        flops=2 * B * d_in * h + 2 * B * h * d_out,
        transcendentals=B * h,
        bytes_accessed=(in_itemsize * (B * d_in + d_in * h_p + h_p * d_out)
                        + 4 * (h_p + d_out)
                        + jnp.dtype(out_dtype).itemsize * B * d_out),
    )

    out = pl.pallas_call(
        mlp_kernel,
        out_shape=jax.ShapeDtypeStruct((B, d_out), out_dtype),
        grid=(grid_len,),
        in_specs=[
            # x: tiled along batch (double-buffered DMA behind the matmuls),
            # full-extent (unpadded) feature dim -> no wasted HBM bytes.
            pl.BlockSpec((tb, d_in), lambda i: (i, 0)),
            # weights / biases: grid-invariant -> stay resident in VMEM.
            pl.BlockSpec((d_in, h_p), lambda i: (0, 0)),
            pl.BlockSpec((1, h_p), lambda i: (0, 0)),
            pl.BlockSpec((h_p, d_out), lambda i: (0, 0)),
            pl.BlockSpec((1, d_out), lambda i: (0, 0)),
        ],
        # unpadded output: full-extent last dim; writeback bytes = B*d_out only.
        out_specs=pl.BlockSpec((tb, d_out), lambda i: (i, 0)),
        compiler_params=pltpu.CompilerParams(
            dimension_semantics=("parallel",),   # megacore sharding on v7x
            vmem_limit_bytes=32 * 1024 * 1024,   # fits v5e/v6e/v7x scoped budgets
        ),
        cost_estimate=cost,
    )(x, w1_p, b1_p, w2_p, b2_p)
    return out


def init_params(key, input_dim=3, hidden_size=5, output_dim=1):
    # Deterministic init mimicking PyTorch nn.Linear default:
    # U(-1/sqrt(fan_in), 1/sqrt(fan_in)) for both weight and bias.
    k1, k2, k3, k4 = jax.random.split(key, 4)
    bound1 = 1.0 / jnp.sqrt(jnp.float32(input_dim))
    bound2 = 1.0 / jnp.sqrt(jnp.float32(hidden_size))
    # stored pre-transposed: [in_features, out_features]
    w1 = jax.random.uniform(k1, (input_dim, hidden_size), jnp.float32, -bound1, bound1)
    b1 = jax.random.uniform(k2, (hidden_size,), jnp.float32, -bound1, bound1)
    w2 = jax.random.uniform(k3, (hidden_size, output_dim), jnp.float32, -bound2, bound2)
    b2 = jax.random.uniform(k4, (output_dim,), jnp.float32, -bound2, bound2)
    return w1, b1, w2, b2


if __name__ == "__main__":
    key = jax.random.PRNGKey(0)
    kx, kp = jax.random.split(key)

    B, input_dim, hidden_size, output_dim = 16, 3, 5, 1
    x = jax.random.normal(kx, (B, input_dim), jnp.float32)
    w1, b1, w2, b2 = init_params(kp, input_dim, hidden_size, output_dim)

    # Force the Pallas path at toy size; tile_b=8 -> grid=(2,) exercises the
    # pipelined, multi-step (and v7x two-core) path.
    out = net_forward(x, w1, b1, w2, b2, tile_b=8, use_pallas=True)
    out = jax.block_until_ready(out)

    # pure-JAX reference check
    ref = jax.nn.sigmoid(x @ w1 + b1) @ w2 + b2
    assert out.shape == (B, output_dim)
    assert jnp.allclose(out, ref, atol=1e-5, rtol=1e-5)

    print("KERNEL_OK")
</pallas_src>

<mosaic_0001>
module attributes {stable_mosaic.version = 11 : i64} {
  func.func @mlp_kernel(%arg0: i32, %arg1: memref<8x3xf32, #tpu.memory_space<vmem>>, %arg2: memref<3x128xf32, #tpu.memory_space<vmem>>, %arg3: memref<1x128xf32, #tpu.memory_space<vmem>>, %arg4: memref<128x1xf32, #tpu.memory_space<vmem>>, %arg5: memref<1x1xf32, #tpu.memory_space<vmem>>, %arg6: memref<8x1xf32, #tpu.memory_space<vmem>>) attributes {dimension_semantics = [#tpu.dimension_semantics<parallel>], iteration_bounds = array<i64: 2>, scalar_prefetch = 0 : i64, scratch_operands = 0 : i64, tpu.core_type = #tpu.core_type<tc>, window_params = [{transform_indices = @transform_0, window_bounds = array<i64: 8, 3>}, {pipeline_mode = #tpu.pipeline_mode<synchronous>, transform_indices = @transform_1, window_bounds = array<i64: 3, 128>}, {pipeline_mode = #tpu.pipeline_mode<synchronous>, transform_indices = @transform_2, window_bounds = array<i64: 1, 128>}, {pipeline_mode = #tpu.pipeline_mode<synchronous>, transform_indices = @transform_3, window_bounds = array<i64: 128, 1>}, {pipeline_mode = #tpu.pipeline_mode<synchronous>, transform_indices = @transform_4, window_bounds = array<i64: 1, 1>}, {transform_indices = @transform_5, window_bounds = array<i64: 8, 1>}]} {
    %c0 = arith.constant 0 : index
    %c0_0 = arith.constant 0 : index
    %0 = vector.load %arg1[%c0, %c0_0] : memref<8x3xf32, #tpu.memory_space<vmem>>, vector<8x3xf32>
    %c0_1 = arith.constant 0 : index
    %c0_2 = arith.constant 0 : index
    %1 = vector.load %arg2[%c0_1, %c0_2] : memref<3x128xf32, #tpu.memory_space<vmem>>, vector<3x128xf32>
    %cst = arith.constant dense<0.000000e+00> : vector<8x128xf32>
    %2 = tpu.matmul %0, %1, %cst {dimension_numbers = #tpu.dot_dimension_numbers<[1], [0], [0], [1], [0, 0, 1, 1], [], []>} : vector<8x3xf32>, vector<3x128xf32>, vector<8x128xf32> -> vector<8x128xf32>
    %c0_3 = arith.constant 0 : index
    %c0_4 = arith.constant 0 : index
    %3 = vector.load %arg3[%c0_3, %c0_4] : memref<1x128xf32, #tpu.memory_space<vmem>>, vector<1x128xf32>
    %4 = vector.broadcast %3 : vector<1x128xf32> to vector<8x128xf32>
    %5 = arith.addf %2, %4 : vector<8x128xf32>
    %6 = arith.negf %5 : vector<8x128xf32>
    %7 = math.exp %6 : vector<8x128xf32>
    %cst_5 = arith.constant 1.000000e+00 : f32
    %8 = vector.broadcast %cst_5 : f32 to vector<8x128xf32>
    %9 = arith.addf %8, %7 : vector<8x128xf32>
    %10 = arith.divf %8, %9 : vector<8x128xf32>
    %c0_6 = arith.constant 0 : index
    %c0_7 = arith.constant 0 : index
    %11 = vector.load %arg4[%c0_6, %c0_7] : memref<128x1xf32, #tpu.memory_space<vmem>>, vector<128x1xf32>
    %cst_8 = arith.constant dense<0.000000e+00> : vector<8x1xf32>
    %12 = tpu.matmul %10, %11, %cst_8 {dimension_numbers = #tpu.dot_dimension_numbers<[1], [0], [0], [1], [0, 0, 1, 1], [], []>} : vector<8x128xf32>, vector<128x1xf32>, vector<8x1xf32> -> vector<8x1xf32>
    %c0_9 = arith.constant 0 : index
    %c0_10 = arith.constant 0 : index
    %13 = vector.load %arg5[%c0_9, %c0_10] : memref<1x1xf32, #tpu.memory_space<vmem>>, vector<1x1xf32>
    %14 = vector.broadcast %13 : vector<1x1xf32> to vector<8x1xf32>
    %15 = arith.addf %12, %14 : vector<8x1xf32>
    %c0_11 = arith.constant 0 : index
    %c0_12 = arith.constant 0 : index
    %16 = vector.load %arg6[%c0_11, %c0_12] : memref<8x1xf32, #tpu.memory_space<vmem>>, vector<8x1xf32>
    tpu.vector_store %arg6[%c0_11, %c0_12], %15 {strides = array<i32>} : memref<8x1xf32, #tpu.memory_space<vmem>>, vector<8x1xf32>,
    return
  }
  func.func @transform_0(%arg0: i32) -> (i32, i32) {
    %c0_i32 = arith.constant 0 : i32
    %c0_i32_0 = arith.constant 0 : i32
    return %arg0, %c0_i32 : i32, i32
  }
  func.func @transform_1(%arg0: i32) -> (i32, i32) {
    %c0_i32 = arith.constant 0 : i32
    %c0_i32_0 = arith.constant 0 : i32
    %c0_i32_1 = arith.constant 0 : i32
    return %c0_i32, %c0_i32_0 : i32, i32
  }
  func.func @transform_2(%arg0: i32) -> (i32, i32) {
    %c0_i32 = arith.constant 0 : i32
    %c0_i32_0 = arith.constant 0 : i32
    %c0_i32_1 = arith.constant 0 : i32
    return %c0_i32, %c0_i32_0 : i32, i32
  }
  func.func @transform_3(%arg0: i32) -> (i32, i32) {
    %c0_i32 = arith.constant 0 : i32
    %c0_i32_0 = arith.constant 0 : i32
    %c0_i32_1 = arith.constant 0 : i32
    return %c0_i32, %c0_i32_0 : i32, i32
  }
  func.func @transform_4(%arg0: i32) -> (i32, i32) {
    %c0_i32 = arith.constant 0 : i32
    %c0_i32_0 = arith.constant 0 : i32
    %c0_i32_1 = arith.constant 0 : i32
    return %c0_i32, %c0_i32_0 : i32, i32
  }
  func.func @transform_5(%arg0: i32) -> (i32, i32) {
    %c0_i32 = arith.constant 0 : i32
    %c0_i32_0 = arith.constant 0 : i32
    return %arg0, %c0_i32 : i32, i32
  }
}

</mosaic_0001>

<llo_original>
// kernel: tpu_custom_call.1
$region0: #{tpu_custom_call.1}
  #allocation0 [shape = 'u32[]', space=smem, size = 0x4, offset = 0x4, fixed_abs, tag = 'smem constant byte address 0x4 - core index']
  #allocation1 [shape = 'u32[144,128]{1,0:T(1,128)}', space=vmem, size = 0x12000, scoped, tag = 'internal scratch']
  #allocation2 [shape = 'f32[1,1]{1,0:T(1,128)S(1)}', space=vmem, size = 0x200, scoped, tag = 'scoped memory for tpu_custom_call.1']
  %s0 = inlined_call_operand.vmem [shape: f32[16,3], index: 0, kind: input, shape index: {}]
  %s1 = inlined_call_operand.vmem [shape: f32[3,128], index: 1, kind: input, shape index: {}]
  %s2 = inlined_call_operand.vmem [shape: f32[1,128], index: 2, kind: input, shape index: {}]
  %s3 = inlined_call_operand.vmem [shape: f32[128,1], index: 3, kind: input, shape index: {}]
  %s4 = inlined_call_operand.<no memory space> [shape: f32[1,1], index: 4, kind: input, shape index: {}]
  %s5 = inlined_call_operand.vmem [shape: f32[16,1], index: 5, kind: output, shape index: {}]
  %s6 = sld [smem:[#allocation0]]
  $region53: #{tpu_custom_call.1} parent=0
    _
  %s8 = ssub.s32 1, %s6
  %s9 = scalar_select 0, %s8, %s6
  %v10 = vstv %s4
  %11 = vst [vmem:[#allocation2] sm:$0x1] %v10
  loop: start=0, step=1, limit=4
  $region2: #{tpu_custom_call.1} parent=0 // loop_pre_header
    _
  $region3: #{tpu_custom_call.1} parent=0 // loop_header
    %s13 = sphi 0, %s17
    %p14 = scmp.ge.s32.totalorder %s13, 4
    %s23 = sphi 0, %s25
    %s26 = sphi 0, %s23
    %s27 = sphi 0, %s26
    %s43 = sphi 0, %s27
    %s47 = sphi 0, %s47
    %s49 = sphi 0, %s47
    %s50 = sphi 0, %s49
    %s64 = sphi 0, %s50
    %s68 = sphi 0, %s68
    %s70 = sphi 0, %s68
    %s71 = sphi 0, %s70
    %s85 = sphi 0, %s71
    %s89 = sphi 0, %s89
    %s91 = sphi 0, %s89
    %s92 = sphi 0, %s91
    %s106 = sphi 0, %s92
    %s110 = sphi 0, %s110
    %s112 = sphi 0, %s110
    %s113 = sphi 0, %s112
    %s127 = sphi 0, %s113
    %s133 = sphi 0, %s135
    %s136 = sphi 0, %s133
    %s137 = sphi 0, %s136
    %s153 = sphi 0, %s137
  $region4: #{tpu_custom_call.1} parent=0 // loop_header_branch
    %16 = sbr.rel (%p14) target = $region8
  $region5: #{tpu_custom_call.1} parent=0 // loop_body
    %s18 = ssub.s32 %s13, 1
    %s19 = ssub.s32 %s13, 2
    %s20 = sadd.s32 %s13, 1
    %s21 = ssub.s32 %s13, %s20
    %p22 = scmp.eq.s32.totalorder %s21, 0
    %s24 = sadd.s32 %s23, 1
    %s25 = scalar_select %p22, %s23, %s24
    %p28 = pneg %p22
    %p29 = scmp.eq.s32.totalorder %s13, 1
    %p30 = por %p28, %p29
    %p31 = scmp.ne.s32.totalorder %s23, %s26
    %p32 = scmp.eq.s32.totalorder %s13, 0
    %p33 = por %p31, %p32
    %p34 = scmp.ne.s32.totalorder %s23, %s26
    %p35 = scmp.eq.s32.totalorder %s18, 1
    %p36 = por %p34, %p35
    %p37 = scmp.ne.s32.totalorder %s26, %s27
    %p38 = scmp.eq.s32.totalorder %s18, 0
    %p39 = por %p37, %p38
    %p40 = scmp.ne.s32.totalorder %s26, %s27
    %p41 = scmp.eq.s32.totalorder %s19, 1
    %p42 = por %p40, %p41
    %p44 = scmp.ne.s32.totalorder %s27, %s43
    %p45 = scmp.eq.s32.totalorder %s19, 0
    %p46 = por %p44, %p45
    %s48 = sadd.s32 %s47, 1
    %p51 = scmp.eq.s32.totalorder %s13, 1
    %p52 = scmp.ne.s32.totalorder %s47, %s49
    %p53 = scmp.eq.s32.totalorder %s13, 0
    %p54 = por %p52, %p53
    %p55 = scmp.ne.s32.totalorder %s47, %s49
    %p56 = scmp.eq.s32.totalorder %s18, 1
    %p57 = por %p55, %p56
    %p58 = scmp.ne.s32.totalorder %s49, %s50
    %p59 = scmp.eq.s32.totalorder %s18, 0
    %p60 = por %p58, %p59
    %p61 = scmp.ne.s32.totalorder %s49, %s50
    %p62 = scmp.eq.s32.totalorder %s19, 1
    %p63 = por %p61, %p62
    %p65 = scmp.ne.s32.totalorder %s50, %s64
    %p66 = scmp.eq.s32.totalorder %s19, 0
    %p67 = por %p65, %p66
    %s69 = sadd.s32 %s68, 1
    %p72 = scmp.eq.s32.totalorder %s13, 1
    %p73 = scmp.ne.s32.totalorder %s68, %s70
    %p74 = scmp.eq.s32.totalorder %s13, 0
    %p75 = por %p73, %p74
    %p76 = scmp.ne.s32.totalorder %s68, %s70
    %p77 = scmp.eq.s32.totalorder %s18, 1
    %p78 = por %p76, %p77
    %p79 = scmp.ne.s32.totalorder %s70, %s71
    %p80 = scmp.eq.s32.totalorder %s18, 0
    %p81 = por %p79, %p80
    %p82 = scmp.ne.s32.totalorder %s70, %s71
    %p83 = scmp.eq.s32.totalorder %s19, 1
    %p84 = por %p82, %p83
    %p86 = scmp.ne.s32.totalorder %s71, %s85
    %p87 = scmp.eq.s32.totalorder %s19, 0
    %p88 = por %p86, %p87
    %s90 = sadd.s32 %s89, 1
    %p93 = scmp.eq.s32.totalorder %s13, 1
    %p94 = scmp.ne.s32.totalorder %s89, %s91
    %p95 = scmp.eq.s32.totalorder %s13, 0
    %p96 = por %p94, %p95
    %p97 = scmp.ne.s32.totalorder %s89, %s91
    %p98 = scmp.eq.s32.totalorder %s18, 1
    %p99 = por %p97, %p98
    %p100 = scmp.ne.s32.totalorder %s91, %s92
    %p101 = scmp.eq.s32.totalorder %s18, 0
    %p102 = por %p100, %p101
    %p103 = scmp.ne.s32.totalorder %s91, %s92
    %p104 = scmp.eq.s32.totalorder %s19, 1
    %p105 = por %p103, %p104
    %p107 = scmp.ne.s32.totalorder %s92, %s106
    %p108 = scmp.eq.s32.totalorder %s19, 0
    %p109 = por %p107, %p108
    %s111 = sadd.s32 %s110, 1
    %p114 = scmp.eq.s32.totalorder %s13, 1
    %p115 = scmp.ne.s32.totalorder %s110, %s112
    %p116 = scmp.eq.s32.totalorder %s13, 0
    %p117 = por %p115, %p116
    %p118 = scmp.ne.s32.totalorder %s110, %s112
    %p119 = scmp.eq.s32.totalorder %s18, 1
    %p120 = por %p118, %p119
    %p121 = scmp.ne.s32.totalorder %s112, %s113
    %p122 = scmp.eq.s32.totalorder %s18, 0
    %p123 = por %p121, %p122
    %p124 = scmp.ne.s32.totalorder %s112, %s113
    %p125 = scmp.eq.s32.totalorder %s19, 1
    %p126 = por %p124, %p125
    %p128 = scmp.ne.s32.totalorder %s113, %s127
    %p129 = scmp.eq.s32.totalorder %s19, 0
    %p130 = por %p128, %p129
    %s131 = ssub.s32 %s13, %s20
    %p132 = scmp.eq.s32.totalorder %s131, 0
    %s134 = sadd.s32 %s133, 1
    %s135 = scalar_select %p132, %s133, %s134
    %p138 = pneg %p132
    %p139 = scmp.eq.s32.totalorder %s13, 1
    %p140 = por %p138, %p139
    %p141 = scmp.ne.s32.totalorder %s133, %s136
    %p142 = scmp.eq.s32.totalorder %s13, 0
    %p143 = por %p141, %p142
    %p144 = scmp.ne.s32.totalorder %s133, %s136
    %p145 = scmp.eq.s32.totalorder %s18, 1
    %p146 = por %p144, %p145
    %p147 = scmp.ne.s32.totalorder %s136, %s137
    %p148 = scmp.eq.s32.totalorder %s18, 0
    %p149 = por %p147, %p148
    %p150 = scmp.ne.s32.totalorder %s136, %s137
    %p151 = scmp.eq.s32.totalorder %s19, 1
    %p152 = por %p150, %p151
    %p154 = scmp.ne.s32.totalorder %s137, %s153
    %p155 = scmp.eq.s32.totalorder %s19, 0
    %p156 = por %p154, %p155
    %p157 = scmp.le.s32.totalorder 1, %s13
    %p158 = scmp.lt.s32.totalorder %s13, 3
    %p159 = pnand %p157, %p158
    %p160 = pneg %p159
    // Predicated region
    $region9: #{tpu_custom_call.1} parent=5 // pred_check
      _
    $region10: #{tpu_custom_call.1} parent=5 // pred_check_branch
      %162 = sbr.rel (%p159) target = $region12
    $region11: #{tpu_custom_call.1} parent=5 // pred_region
      %s163 = ssub.s32 %s13, 1
      // Predicated region
      $region13: #{tpu_custom_call.1} parent=11 // pred_check
        %p164 = pneg %p60
      $region14: #{tpu_custom_call.1} parent=11 // pred_check_branch
        %166 = sbr.rel (%p164) target = $region16
      $region15: #{tpu_custom_call.1} parent=11 // pred_region
        _
      $region16: #{tpu_custom_call.1} parent=11 // pred_fallthru
        _
      // Predicated region
      $region17: #{tpu_custom_call.1} parent=11 // pred_check
        %p167 = pneg %p81
      $region18: #{tpu_custom_call.1} parent=11 // pred_check_branch
        %169 = sbr.rel (%p167) target = $region20
      $region19: #{tpu_custom_call.1} parent=11 // pred_region
        _
      $region20: #{tpu_custom_call.1} parent=11 // pred_fallthru
        _
      // Predicated region
      $region21: #{tpu_custom_call.1} parent=11 // pred_check
        %p170 = pneg %p102
      $region22: #{tpu_custom_call.1} parent=11 // pred_check_branch
        %172 = sbr.rel (%p170) target = $region24
      $region23: #{tpu_custom_call.1} parent=11 // pred_region
        _
      $region24: #{tpu_custom_call.1} parent=11 // pred_fallthru
        _
      // Predicated region
      $region25: #{tpu_custom_call.1} parent=11 // pred_check
        %p173 = pneg %p123
      $region26: #{tpu_custom_call.1} parent=11 // pred_check_branch
        %175 = sbr.rel (%p173) target = $region28
      $region27: #{tpu_custom_call.1} parent=11 // pred_region
        _
      $region28: #{tpu_custom_call.1} parent=11 // pred_fallthru
        _
    $region12: #{tpu_custom_call.1} parent=5 // pred_fallthru
      _
    %p176 = scmp.lt.s32.totalorder %s13, 2
    // Predicated region
    $region29: #{tpu_custom_call.1} parent=5 // pred_check
      %p177 = pneg %p176
    $region30: #{tpu_custom_call.1} parent=5 // pred_check_branch
      %179 = sbr.rel (%p177) target = $region32
    $region31: #{tpu_custom_call.1} parent=5 // pred_region
      // Predicated region
      $region33: #{tpu_custom_call.1} parent=31 // pred_check
        %p180 = pneg %p33
      $region34: #{tpu_custom_call.1} parent=31 // pred_check_branch
        %182 = sbr.rel (%p180) target = $region36
      $region35: #{tpu_custom_call.1} parent=31 // pred_region
        %p183 = scmp.lt.s32.totalorder %s13, 1
        %s184 = scalar_select %p183, %s13, 1
        %s185 = smul.addr %s184, 8
        %s186 = scalar_lea.vmem %s0, %s185
      $region36: #{tpu_custom_call.1} parent=31 // pred_fallthru
        _
    $region32: #{tpu_custom_call.1} parent=5 // pred_fallthru
      _
    %p187 = scmp.le.s32.totalorder 1, %s13
    %p188 = scmp.lt.s32.totalorder %s13, 3
    %p189 = pnand %p187, %p188
    %p190 = pneg %p189
    // Predicated region
    $region37: #{tpu_custom_call.1} parent=5 // pred_check
      _
    $region38: #{tpu_custom_call.1} parent=5 // pred_check_branch
      %192 = sbr.rel (%p189) target = $region40
    $region39: #{tpu_custom_call.1} parent=5 // pred_region
      %s193 = ssub.s32 %s13, 1
      %p194 = scmp.lt.s32.totalorder %s18, 1
      %s195 = scalar_select %p194, %s18, 1
      %s196 = smul.addr %s195, 8
      %s197 = scalar_lea.vmem %s0, %s196
      %p198 = pneg %p39
      %p199 = pneg %p36
      %p200 = pneg %p60
      %p201 = pneg %p57
      %p202 = pneg %p81
      %p203 = pneg %p78
      %p204 = pneg %p102
      %p205 = pneg %p99
      %p206 = pneg %p123
      %p207 = pneg %p120
      %p208 = pneg %p149
      %p209 = pneg %p146
      %p210 = scmp.lt.s32.totalorder %s18, 1
      %s211 = scalar_select %p210, %s18, 1
      %s212 = smul.addr %s211, 8
      %s213 = scalar_lea.vmem %s5, %s212
      %p214 = scmp.lt.s32.totalorder %s18, 1
      %s215 = scalar_select %p214, %s18, 1
      %s216 = smul.addr %s215, 8
      %s217 = scalar_lea.vmem %s0, %s216
      %p218 = scmp.lt.s32.totalorder %s18, 1
      %s219 = scalar_select %p218, %s18, 1
      %s220 = smul.addr %s219, 8
      %s221 = scalar_lea.vmem %s5, %s220
      %v222 = vld [vmem:[%s217] sm:$0xff]
      %v223 = vld [vmem:[%s1] sm:$0x7]
      %v224 = vld [vmem:[%s2] sm:$0x1]
      %v226 = vlaneseq
      %v227 = vshrl.u32 %v226, 7
      %v228 = vsub.s32 0, %v227
      %v229 = vrot.slane %v224, %v228
      %vm231 = vcmask 23552
      %v233 = vsel %vm231, %v222, 0
      %vm235 = vcmask 1042432
      %v237 = vsel %vm235, %v223, 0
      %239 = vmatprep.subr.mxu0 0.0
      %240 = vmatpush1.msra.mxu0 %v237
      %241 = vmatprep.subr.mxu0 0.0
      %242 = vmatpush1.msra.mxu0 0.0
      %243 = vmatprep.subr.mxu0 0.0
      %244 = vmatpush1.msra.mxu0 0.0
      %245 = vmatprep.subr.mxu0 0.0
      %246 = vmatpush1.msra.mxu0 0.0
      %247 = vmatprep.subr.mxu0 0.0
      %248 = vmatpush1.msra.mxu0 0.0
      %249 = vmatprep.subr.mxu0 0.0
      %250 = vmatpush1.msra.mxu0 0.0
      %251 = vmatprep.subr.mxu0 0.0
      %252 = vmatpush1.msra.mxu0 0.0
      %253 = vmatprep.subr.mxu0 0.0
      %254 = vmatpush1.msra.mxu0 0.0
      %255 = vmatprep.subr.mxu0 0.0
      %256 = vmatpush1.msra.mxu0 0.0
      %257 = vmatprep.subr.mxu0 0.0
      %258 = vmatpush1.msra.mxu0 0.0
      %259 = vmatprep.subr.mxu0 0.0
      %260 = vmatpush1.msra.mxu0 0.0
      %261 = vmatprep.subr.mxu0 0.0
      %262 = vmatpush1.msra.mxu0 0.0
      %263 = vmatprep.subr.mxu0 0.0
      %264 = vmatpush1.msra.mxu0 0.0
      %265 = vmatprep.subr.mxu0 0.0
      %266 = vmatpush1.msra.mxu0 0.0
      %267 = vmatprep.subr.mxu0 0.0
      %268 = vmatpush1.msra.mxu0 0.0
      %269 = vmatprep.subr.mxu0 0.0
      %270 = vmatpush1.msra.mxu0 0.0
      %271 = vmatprep.subr.mxu0 0.0
      %272 = vmatpush1.msra.mxu0 0.0
      %273 = vmatprep.subr.mxu0 0.0
      %274 = vmatpush1.msra.mxu0 0.0
      %275 = vmatprep.subr.mxu0 0.0
      %276 = vmatpush1.msra.mxu0 0.0
      %277 = vmatprep.subr.mxu0 0.0
      %278 = vmatpush1.msra.mxu0 0.0
      %279 = vmatprep.subr.mxu0 0.0
      %280 = vmatpush1.msra.mxu0 0.0
      %281 = vmatprep.subr.mxu0 0.0
      %282 = vmatpush1.msra.mxu0 0.0
      %283 = vmatprep.subr.mxu0 0.0
      %284 = vmatpush1.msra.mxu0 0.0
      %285 = vmatprep.subr.mxu0 0.0
      %286 = vmatpush1.msra.mxu0 0.0
      %287 = vmatprep.subr.mxu0 0.0
      %288 = vmatpush1.msra.mxu0 0.0
      %289 = vmatprep.subr.mxu0 0.0
      %290 = vmatpush1.msra.mxu0 0.0
      %291 = vmatprep.subr.mxu0 0.0
      %292 = vmatpush1.msra.mxu0 0.0
      %293 = vmatprep.subr.mxu0 0.0
      %294 = vmatpush1.msra.mxu0 0.0
      %295 = vmatprep.subr.mxu0 0.0
      %296 = vmatpush1.msra.mxu0 0.0
      %297 = vmatprep.subr.mxu0 0.0
      %298 = vmatpush1.msra.mxu0 0.0
      %299 = vmatprep.subr.mxu0 0.0
      %300 = vmatpush1.msra.mxu0 0.0
      %301 = vmatprep.subr.mxu0 0.0
      %302 = vmatpush1.msra.mxu0 0.0
      %303 = vmatprep.mubr.f32.mxu0 0.0
      %304 = vmatmul.mubr.f32.gmra.mrb[0].mxu0 %v233
      %v305 = vpop.f32.mrb[0].mxu0
      %v306 = vadd.f32 %v229, %v305
      %v307 = vpop.f32.mrb[0].mxu0
      %308 = vdwg.mxu0
      %v309 = vxor.u32 %v306, 2147483648
      %v310 = vmul.f32 %v309, 1.442695
      %v311 = vpow.pop %v310
      %v312 = vadd.f32 %v311, 1.0
      %v313 = vrcp.pop %v312
      %v314 = vmul.f32 1.0, %v313
      %v315 = vld [vmem:[%s3] sm:$0xff]
      %v316 = vld [vmem:[%s3 + $0x8] sm:$0xff]
      %v317 = vld [vmem:[%s3 + $0x10] sm:$0xff]
      %v318 = vld [vmem:[%s3 + $0x18] sm:$0xff]
      %v319 = vld [vmem:[%s3 + $0x20] sm:$0xff]
      %v320 = vld [vmem:[%s3 + $0x28] sm:$0xff]
      %v321 = vld [vmem:[%s3 + $0x30] sm:$0xff]
      %v322 = vld [vmem:[%s3 + $0x38] sm:$0xff]
      %v323 = vld [vmem:[%s3 + $0x40] sm:$0xff]
      %v324 = vld [vmem:[%s3 + $0x48] sm:$0xff]
      %v325 = vld [vmem:[%s3 + $0x50] sm:$0xff]
      %v326 = vld [vmem:[%s3 + $0x58] sm:$0xff]
      %v327 = vld [vmem:[%s3 + $0x60] sm:$0xff]
      %v328 = vld [vmem:[%s3 + $0x68] sm:$0xff]
      %v329 = vld [vmem:[%s3 + $0x70] sm:$0xff]
      %v330 = vld [vmem:[%s3 + $0x78] sm:$0xff]
      %v331 = vld [vmem:[#allocation2] sm:$0x1]
      %v333 = vlaneseq
      %v334 = vshrl.u32 %v333, 7
      %v335 = vsub.s32 0, %v334
      %v336 = vrot.slane %v331, %v335
      %338 = vmatprep.subr.mxu0 0.0
      %339 = vmatpush1.msra.mxu0 %v315
      %340 = vmatprep.subr.mxu0 0.0
      %341 = vmatpush1.msra.mxu0 %v316
      %342 = vmatprep.subr.mxu0 0.0
      %343 = vmatpush1.msra.mxu0 %v317
      %344 = vmatprep.subr.mxu0 0.0
      %345 = vmatpush1.msra.mxu0 %v318
      %346 = vmatprep.subr.mxu0 0.0
      %347 = vmatpush1.msra.mxu0 %v319
      %348 = vmatprep.subr.mxu0 0.0
      %349 = vmatpush1.msra.mxu0 %v320
      %350 = vmatprep.subr.mxu0 0.0
      %351 = vmatpush1.msra.mxu0 %v321
      %352 = vmatprep.subr.mxu0 0.0
      %353 = vmatpush1.msra.mxu0 %v322
      %354 = vmatprep.subr.mxu0 0.0
      %355 = vmatpush1.msra.mxu0 %v323
      %356 = vmatprep.subr.mxu0 0.0
      %357 = vmatpush1.msra.mxu0 %v324
      %358 = vmatprep.subr.mxu0 0.0
      %359 = vmatpush1.msra.mxu0 %v325
      %360 = vmatprep.subr.mxu0 0.0
      %361 = vmatpush1.msra.mxu0 %v326
      %362 = vmatprep.subr.mxu0 0.0
      %363 = vmatpush1.msra.mxu0 %v327
      %364 = vmatprep.subr.mxu0 0.0
      %365 = vmatpush1.msra.mxu0 %v328
      %366 = vmatprep.subr.mxu0 0.0
      %367 = vmatpush1.msra.mxu0 %v329
      %368 = vmatprep.subr.mxu0 0.0
      %369 = vmatpush1.msra.mxu0 %v330
      %370 = vmatprep.subr.mxu0 0.0
      %371 = vmatpush1.msra.mxu0 0.0
      %372 = vmatprep.subr.mxu0 0.0
      %373 = vmatpush1.msra.mxu0 0.0
      %374 = vmatprep.subr.mxu0 0.0
      %375 = vmatpush1.msra.mxu0 0.0
      %376 = vmatprep.subr.mxu0 0.0
      %377 = vmatpush1.msra.mxu0 0.0
      %378 = vmatprep.subr.mxu0 0.0
      %379 = vmatpush1.msra.mxu0 0.0
      %380 = vmatprep.subr.mxu0 0.0
      %381 = vmatpush1.msra.mxu0 0.0
      %382 = vmatprep.subr.mxu0 0.0
      %383 = vmatpush1.msra.mxu0 0.0
      %384 = vmatprep.subr.mxu0 0.0
      %385 = vmatpush1.msra.mxu0 0.0
      %386 = vmatprep.subr.mxu0 0.0
      %387 = vmatpush1.msra.mxu0 0.0
      %388 = vmatprep.subr.mxu0 0.0
      %389 = vmatpush1.msra.mxu0 0.0
      %390 = vmatprep.subr.mxu0 0.0
      %391 = vmatpush1.msra.mxu0 0.0
      %392 = vmatprep.subr.mxu0 0.0
      %393 = vmatpush1.msra.mxu0 0.0
      %394 = vmatprep.subr.mxu0 0.0
      %395 = vmatpush1.msra.mxu0 0.0
      %396 = vmatprep.subr.mxu0 0.0
      %397 = vmatpush1.msra.mxu0 0.0
      %398 = vmatprep.subr.mxu0 0.0
      %399 = vmatpush1.msra.mxu0 0.0
      %400 = vmatprep.subr.mxu0 0.0
      %401 = vmatpush1.msra.mxu0 0.0
      %402 = vmatprep.mubr.f32.mxu0 0.0
      %403 = vmatmul.mubr.f32.gmra.mrb[0].mxu0 %v314
      %v404 = vpop.f32.mrb[0].mxu0
      %v405 = vadd.f32 %v336, %v404
      %v406 = vpop.f32.mrb[0].mxu0
      %407 = vdwg.mxu0
      %vm408 = vcmask 7168
      %409 = vst.msk [vmem:[%s221] sm:$0xff] %vm408, %v405
      %p410 = scmp.lt.s32.totalorder %s18, 1
      %s411 = scalar_select %p410, %s18, 1
      %s412 = smul.addr %s411, 8
      %s413 = scalar_lea.vmem %s5, %s412
      // Predicated region
      $region41: #{tpu_custom_call.1} parent=39 // pred_check
        %p414 = pneg %p146
      $region42: #{tpu_custom_call.1} parent=39 // pred_check_branch
        %416 = sbr.rel (%p414) target = $region44
      $region43: #{tpu_custom_call.1} parent=39 // pred_region
        _
      $region44: #{tpu_custom_call.1} parent=39 // pred_fallthru
        _
    $region40: #{tpu_custom_call.1} parent=5 // pred_fallthru
      _
    %p417 = scmp.le.s32.totalorder 2, %s13
    // Predicated region
    $region45: #{tpu_custom_call.1} parent=5 // pred_check
      %p418 = pneg %p417
    $region46: #{tpu_custom_call.1} parent=5 // pred_check_branch
      %420 = sbr.rel (%p418) target = $region48
    $region47: #{tpu_custom_call.1} parent=5 // pred_region
      %s421 = ssub.s32 %s13, 2
      // Predicated region
      $region49: #{tpu_custom_call.1} parent=47 // pred_check
        %p422 = pneg %p152
      $region50: #{tpu_custom_call.1} parent=47 // pred_check_branch
        %424 = sbr.rel (%p422) target = $region52
      $region51: #{tpu_custom_call.1} parent=47 // pred_region
        %p425 = scmp.lt.s32.totalorder %s19, 1
        %s426 = scalar_select %p425, %s19, 1
        %s427 = smul.addr %s426, 8
        %s428 = scalar_lea.vmem %s5, %s427
      $region52: #{tpu_custom_call.1} parent=47 // pred_fallthru
        _
    $region48: #{tpu_custom_call.1} parent=5 // pred_fallthru
      _
  $region6: #{tpu_custom_call.1} parent=0 // loop_footer
    %s17 = sadd.s32 1, %s13
  $region7: #{tpu_custom_call.1} parent=0 // loop_footer_branch
    %12 = sbr.rel target = $region3
  $region8: #{tpu_custom_call.1} parent=0 // loop_exit
    _

</llo_original>
